<compile_context>
chip_gen: v5e
topology: v5e:2x2
jax: 0.10.0
libtpu: 0.0.40
codegen_flags: <defaults>
</compile_context>

<pallas_src>
import functools

import numpy as np

import jax
import jax.numpy as jnp
from jax import lax
from jax.experimental import pallas as pl
from jax.experimental.pallas import tpu as pltpu

NEG_INF = -1e10  # matches the reference's -10000000000.0


def _softmax_last(v):
    m = jnp.max(v, axis=-1, keepdims=True)
    e = jnp.exp(v - m)
    s = jnp.sum(e, axis=-1, keepdims=True)
    # approx reciprocal runs on the EUP slot (same as exp) instead of the VALU divide.
    return e * pl.reciprocal(s, approx=True)


def _graph_crf_kernel(len_ref, dist_ref, logits_ref, w_ref, b_ref, out_ref, *,
                      K, out_label):
    """One grid step == one block of Bt batch elements.

    len_ref    : (Bt, 1)   int32  valid token count per element
    dist_ref   : (N, N)    f32    exp(-0.1*d^2) * (1 - eye)   (shared across batch)
    logits_ref : (Bt, N, C) f32   raw concatenated logits (unmasked)
    w_ref      : (C, C)    f32
    b_ref      : (1, C)    f32
    out_ref    : (Bt, N, C) f32
    """
    Bt, N, C = logits_ref.shape

    # ---------- masks generated in-kernel (cheap VPU iota/compare, no HBM traffic) ----
    row = lax.broadcasted_iota(jnp.int32, (N, C), 0)
    col = lax.broadcasted_iota(jnp.int32, (N, C), 1)
    tm = (((row < N - 1) & (col < out_label)) |
          ((row == N - 1) & (col >= out_label))).astype(jnp.float32)     # (N, C)
    neg = (1.0 - tm) * NEG_INF                                           # (N, C)
    tm_b = tm[None]                                                      # hoisted bcast

    cols = lax.broadcasted_iota(jnp.int32, (Bt, N), 1)
    lens = len_ref[...]                                                  # (Bt, 1) int32
    # adjs[b][:, len_b:-1] = 0  ->  column keep-mask, diagonal handled inside dist_ref
    colmask = jnp.where((cols >= lens) & (cols < N - 1), 0.0, 1.0)       # (Bt, N)

    # A == adjs * distance (the length mask only depends on the column index, so it
    # folds onto the shared distance matrix).  Built once, reused for all K iterations.
    A = colmask[:, None, :] * dist_ref[...][None, :, :]                  # (Bt, N, N)

    # Broadcast W once for the batched matmul (hoisted out of the K loop).
    Wb = jnp.broadcast_to(w_ref[...][None], (Bt, C, C))                  # (Bt, C, C)
    b = b_ref[...][None]                                                 # (1, 1, C)

    x = logits_ref[...] + neg[None]        # masked in_logits (reference: in_logits + mask)
    # Loop-invariant additive term of the reference update:
    #   dis1 = msg @ W + b + in_logits_masked + mask   ==  msg @ W + base
    base = x + neg[None] + b

    dis = _softmax_last(x)
    dis1 = x
    for j in range(K):                     # K == 2, statically unrolled
        msg = jnp.einsum('bij,bjc->bic', A, dis * tm_b,
                         preferred_element_type=jnp.float32)             # (Bt, N, C)
        dis1 = jnp.einsum('bic,bcd->bid', msg, Wb,
                          preferred_element_type=jnp.float32) + base
        if j < K - 1:
            dis = _softmax_last(dis1)

    out_ref[...] = dis1


def _choose_batch_block(B):
    """Batch block size: either the whole (small) batch, or a multiple of 8 capped at 64
    with >= 2 grid steps so the "parallel" grid axis can feed v7x's second TensorCore.
    The multiple-of-8 rule satisfies the BlockSpec sublane constraint for the (Bt, 1)
    length input."""
    if B <= 8:
        return B
    half = -(-B // 2)                 # ceil(B / 2)
    bt = -(-half // 8) * 8            # round up to a multiple of 8
    return min(64, bt)


@functools.partial(jax.jit, static_argnames=("out_label", "out_int", "K"))
def graph_crf_forward(outlogits, outlogits1, length, params, *, out_label, out_int, K=2):
    """Replicates graphCRFmodel.forward. Returns (slot_logits, intent_logits).

    Note: the reference also computes a `transfer` matrix from label_emb/linear1 that is
    never used for the returned outputs; that dead code is intentionally dropped.
    """
    B, T, _ = outlogits.shape
    C = out_label + out_int
    N = T + 1

    # ----- plain-JAX glue: concat/pad of logits (O(B*N*C), required data movement) -----
    pad1 = jnp.zeros((B, T, out_int), jnp.float32)
    pad2 = jnp.zeros((B, out_label), jnp.float32)
    in_logits = jnp.concatenate([outlogits.astype(jnp.float32), pad1], axis=-1)   # (B,T,C)
    in_logits1 = jnp.concatenate([pad2, outlogits1.astype(jnp.float32)], axis=-1)  # (B,C)
    in_logits = jnp.concatenate([in_logits, in_logits1[:, None, :]], axis=-2)      # (B,N,C)

    # Shared (N, N) distance kernel; fold in the zero diagonal from adjs.
    idx = jnp.arange(N)
    distance = jnp.abs(idx[None, :] - idx[:, None]).astype(jnp.float32)
    distance = distance.at[:N - 1, -1].set(1.0)
    distance = distance.at[-1, :N - 1].set(1.0)
    distance = jnp.exp(-0.1 * distance * distance)
    distance = distance * (1.0 - jnp.eye(N, dtype=jnp.float32))

    W = params["w"].reshape(C, C).astype(jnp.float32)
    b = params["b"].reshape(1, C).astype(jnp.float32)

    # ----- batch blocking (pad B up to a multiple of the block size) -----
    Bt = _choose_batch_block(B)
    n_blocks = -(-B // Bt)
    B_pad = n_blocks * Bt
    if B_pad != B:
        in_logits = jnp.pad(in_logits, ((0, B_pad - B), (0, 0), (0, 0)))
        length = jnp.pad(length, (0, B_pad - B))
    length2d = length.astype(jnp.int32).reshape(B_pad, 1)

    kernel = functools.partial(_graph_crf_kernel, K=K, out_label=out_label)
    out = pl.pallas_call(
        kernel,
        out_shape=jax.ShapeDtypeStruct((B_pad, N, C), jnp.float32),
        grid=(n_blocks,),
        in_specs=[
            pl.BlockSpec((Bt, 1), lambda i: (i, 0)),        # lengths
            pl.BlockSpec((N, N), lambda i: (0, 0)),         # distance (shared)
            pl.BlockSpec((Bt, N, C), lambda i: (i, 0, 0)),  # raw logits
            pl.BlockSpec((C, C), lambda i: (0, 0)),         # W
            pl.BlockSpec((1, C), lambda i: (0, 0)),         # b
        ],
        out_specs=pl.BlockSpec((Bt, N, C), lambda i: (i, 0, 0)),
        compiler_params=pltpu.CompilerParams(dimension_semantics=("parallel",)),
    )(length2d, distance, in_logits, W, b)

    out = out[:B]
    slot_logits = out[:, :-1, :out_label]      # (B, T, out_label)
    intent_logits = out[:, -1, out_label:]     # (B, out_int)
    return slot_logits, intent_logits


def _reference_forward(outlogits, outlogits1, length, params, out_label, out_int, K=2):
    """Plain-JAX transliteration of the PyTorch forward (for correctness checking)."""
    B, T, _ = outlogits.shape
    C = out_label + out_int
    N = T + 1
    pad1 = jnp.zeros((B, T, out_int), jnp.float32)
    pad2 = jnp.zeros((B, out_label), jnp.float32)
    in_logits = jnp.concatenate([outlogits, pad1], -1)
    in_logits1 = jnp.concatenate([pad2, outlogits1], -1)
    in_logits = jnp.concatenate([in_logits, in_logits1[:, None, :]], -2)

    idx = jnp.arange(N)
    distance = jnp.abs(idx[None, :] - idx[:, None]).astype(jnp.float32)
    distance = distance.at[:N - 1, -1].set(1.0)
    distance = distance.at[-1, :N - 1].set(1.0)

    col = jnp.arange(N)
    zero_cols = (col[None, None, :] >= length[:, None, None]) & (col[None, None, :] < N - 1)
    adjs = jnp.where(zero_cols, 0.0, 1.0) * jnp.ones((B, N, N), jnp.float32)
    adjs = adjs * (1.0 - jnp.eye(N, dtype=jnp.float32))[None]

    tagmask = jnp.zeros((B, N, C), jnp.float32)
    tagmask = tagmask.at[:, :N - 1, :out_label].set(1.0)
    tagmask = tagmask.at[:, N - 1, out_label:].set(1.0)

    in_logits = in_logits + (1.0 - tagmask) * NEG_INF
    distance = jnp.exp(-0.1 * distance * distance)
    W = params["w"].reshape(C, C)
    bb = params["b"].reshape(C)
    dis = jax.nn.softmax(in_logits, -1)
    dis1 = in_logits
    for j in range(K):
        dis1 = jnp.einsum('bij,bjc->bic', adjs * distance[None], dis * tagmask)
        dis1 = jnp.einsum('bic,cd->bid', dis1, W) + bb
        dis1 = dis1 + in_logits + (1.0 - tagmask) * NEG_INF
        if j < K - 1:
            dis = jax.nn.softmax(dis1, -1)
    return dis1[:, :-1, :out_label], dis1[:, -1, out_label:]


if __name__ == "__main__":
    key = jax.random.PRNGKey(0)
    B, T = 2, 8
    out_label, out_int = 24, 8
    C = out_label + out_int

    k1, k2, k3, k4, k5 = jax.random.split(key, 5)
    outlogits = jax.random.normal(k1, (B, T, out_label), jnp.float32)
    outlogits1 = jax.random.normal(k2, (B, out_int), jnp.float32)
    length = jnp.array([T, 5], dtype=jnp.int32)

    # Parameter init mirroring graphCRFmodel.__init__ (label_emb/linear1 are carried for
    # module fidelity but are dead w.r.t. the forward outputs, matching the reference).
    xavier_std = (2.0 / (C * C + C)) ** 0.5      # torch xavier_normal_ for shape (1, C, C)
    params = {
        "label_emb": jax.random.normal(k3, (C, 128), jnp.float32),
        "linear1_w": jax.random.uniform(k4, (128, 128), jnp.float32,
                                        minval=-1.0 / 128 ** 0.5, maxval=1.0 / 128 ** 0.5),
        "w": jax.random.normal(k5, (1, C, C), jnp.float32) * xavier_std,
        "b": jnp.zeros((C,), jnp.float32),
    }

    # --- small run (single block) ---
    slot_out, intent_out = graph_crf_forward(
        outlogits, outlogits1, length, params, out_label=out_label, out_int=out_int, K=2)
    jax.block_until_ready((slot_out, intent_out))
    assert slot_out.shape == (B, T, out_label)
    assert intent_out.shape == (B, out_int)

    ref_slot, ref_int = _reference_forward(outlogits, outlogits1, length, params,
                                           out_label, out_int, K=2)
    # Tolerance covers the approx-reciprocal softmax normalization.
    np.testing.assert_allclose(np.asarray(slot_out), np.asarray(ref_slot), rtol=5e-2, atol=5e-2)
    np.testing.assert_allclose(np.asarray(intent_out), np.asarray(ref_int), rtol=5e-2, atol=5e-2)

    # --- larger batch: exercises batch blocking, padding and a multi-step parallel grid ---
    B2 = 12
    kk1, kk2 = jax.random.split(jax.random.PRNGKey(1))
    outlogits_b = jax.random.normal(kk1, (B2, T, out_label), jnp.float32)
    outlogits1_b = jax.random.normal(kk2, (B2, out_int), jnp.float32)
    length_b = jnp.minimum(jnp.arange(1, B2 + 1), T).astype(jnp.int32)

    slot_b, int_b = graph_crf_forward(
        outlogits_b, outlogits1_b, length_b, params, out_label=out_label, out_int=out_int, K=2)
    jax.block_until_ready((slot_b, int_b))
    assert slot_b.shape == (B2, T, out_label)
    assert int_b.shape == (B2, out_int)

    ref_slot_b, ref_int_b = _reference_forward(outlogits_b, outlogits1_b, length_b, params,
                                               out_label, out_int, K=2)
    np.testing.assert_allclose(np.asarray(slot_b), np.asarray(ref_slot_b), rtol=5e-2, atol=5e-2)
    np.testing.assert_allclose(np.asarray(int_b), np.asarray(ref_int_b), rtol=5e-2, atol=5e-2)

    print("KERNEL_OK")
</pallas_src>

<mosaic_0001>
module attributes {stable_mosaic.version = 11 : i64} {
  func.func @_graph_crf_kernel(%arg0: i32, %arg1: memref<2x1xi32, #tpu.memory_space<vmem>>, %arg2: memref<9x9xf32, #tpu.memory_space<vmem>>, %arg3: memref<2x9x32xf32, #tpu.memory_space<vmem>>, %arg4: memref<32x32xf32, #tpu.memory_space<vmem>>, %arg5: memref<1x32xf32, #tpu.memory_space<vmem>>, %arg6: memref<2x9x32xf32, #tpu.memory_space<vmem>>) attributes {dimension_semantics = [#tpu.dimension_semantics<parallel>], iteration_bounds = array<i64: 1>, scalar_prefetch = 0 : i64, scratch_operands = 0 : i64, tpu.core_type = #tpu.core_type<tc>, window_params = [{transform_indices = @transform_0, window_bounds = array<i64: 2, 1>}, {pipeline_mode = #tpu.pipeline_mode<synchronous>, transform_indices = @transform_1, window_bounds = array<i64: 9, 9>}, {transform_indices = @transform_2, window_bounds = array<i64: 2, 9, 32>}, {pipeline_mode = #tpu.pipeline_mode<synchronous>, transform_indices = @transform_3, window_bounds = array<i64: 32, 32>}, {pipeline_mode = #tpu.pipeline_mode<synchronous>, transform_indices = @transform_4, window_bounds = array<i64: 1, 32>}, {transform_indices = @transform_5, window_bounds = array<i64: 2, 9, 32>}]} {
    %0 = tpu.iota {dimensions = array<i32: 0>} : vector<9x32xi32>
    %1 = tpu.iota {dimensions = array<i32: 1>} : vector<9x32xi32>
    %c8_i32 = arith.constant 8 : i32
    %2 = vector.broadcast %c8_i32 : i32 to vector<9x32xi32>
    %3 = arith.cmpi slt, %0, %2 : vector<9x32xi32>
    %c24_i32 = arith.constant 24 : i32
    %4 = vector.broadcast %c24_i32 : i32 to vector<9x32xi32>
    %5 = arith.cmpi slt, %1, %4 : vector<9x32xi32>
    %6 = arith.andi %3, %5 : vector<9x32xi1>
    %c8_i32_0 = arith.constant 8 : i32
    %7 = vector.broadcast %c8_i32_0 : i32 to vector<9x32xi32>
    %8 = arith.cmpi eq, %0, %7 : vector<9x32xi32>
    %c24_i32_1 = arith.constant 24 : i32
    %9 = vector.broadcast %c24_i32_1 : i32 to vector<9x32xi32>
    %10 = arith.cmpi sge, %1, %9 : vector<9x32xi32>
    %11 = arith.andi %8, %10 : vector<9x32xi1>
    %12 = arith.ori %6, %11 : vector<9x32xi1>
    %13 = arith.extui %12 : vector<9x32xi1> to vector<9x32xi32>
    %14 = arith.sitofp %13 : vector<9x32xi32> to vector<9x32xf32>
    %cst = arith.constant 1.000000e+00 : f32
    %15 = vector.broadcast %cst : f32 to vector<9x32xf32>
    %16 = arith.subf %15, %14 : vector<9x32xf32>
    %cst_2 = arith.constant -1.000000e+10 : f32
    %17 = vector.broadcast %cst_2 : f32 to vector<9x32xf32>
    %18 = arith.mulf %16, %17 : vector<9x32xf32>
    %19 = vector.shape_cast %14 : vector<9x32xf32> to vector<1x9x32xf32>
    %20 = tpu.iota {dimensions = array<i32: 1>} : vector<2x9xi32>
    %c0 = arith.constant 0 : index
    %c0_3 = arith.constant 0 : index
    %21 = vector.load %arg1[%c0, %c0_3] : memref<2x1xi32, #tpu.memory_space<vmem>>, vector<2x1xi32>
    %22 = vector.broadcast %21 : vector<2x1xi32> to vector<2x9xi32>
    %23 = arith.cmpi sge, %20, %22 : vector<2x9xi32>
    %c8_i32_4 = arith.constant 8 : i32
    %24 = vector.broadcast %c8_i32_4 : i32 to vector<2x9xi32>
    %25 = arith.cmpi slt, %20, %24 : vector<2x9xi32>
    %26 = arith.andi %23, %25 : vector<2x9xi1>
    %cst_5 = arith.constant 0.000000e+00 : f32
    %cst_6 = arith.constant 1.000000e+00 : f32
    %27 = vector.broadcast %cst_5 : f32 to vector<2x9xf32>
    %28 = vector.broadcast %cst_6 : f32 to vector<2x9xf32>
    %29 = arith.select %26, %27, %28 : vector<2x9xi1>, vector<2x9xf32>
    %30 = vector.shape_cast %29 : vector<2x9xf32> to vector<2x1x9xf32>
    %c0_7 = arith.constant 0 : index
    %c0_8 = arith.constant 0 : index
    %31 = vector.load %arg2[%c0_7, %c0_8] : memref<9x9xf32, #tpu.memory_space<vmem>>, vector<9x9xf32>
    %32 = vector.shape_cast %31 : vector<9x9xf32> to vector<1x9x9xf32>
    %33 = vector.broadcast %30 : vector<2x1x9xf32> to vector<2x9x9xf32>
    %34 = vector.broadcast %32 : vector<1x9x9xf32> to vector<2x9x9xf32>
    %35 = arith.mulf %33, %34 : vector<2x9x9xf32>
    %c0_9 = arith.constant 0 : index
    %c0_10 = arith.constant 0 : index
    %36 = vector.load %arg4[%c0_9, %c0_10] : memref<32x32xf32, #tpu.memory_space<vmem>>, vector<32x32xf32>
    %37 = vector.shape_cast %36 : vector<32x32xf32> to vector<1x32x32xf32>
    %38 = vector.shape_cast %37 : vector<1x32x32xf32> to vector<1x32x32xf32>
    %39 = vector.broadcast %38 : vector<1x32x32xf32> to vector<2x32x32xf32>
    %c0_11 = arith.constant 0 : index
    %c0_12 = arith.constant 0 : index
    %40 = vector.load %arg5[%c0_11, %c0_12] : memref<1x32xf32, #tpu.memory_space<vmem>>, vector<1x32xf32>
    %41 = vector.shape_cast %40 : vector<1x32xf32> to vector<1x1x32xf32>
    %c0_13 = arith.constant 0 : index
    %c0_14 = arith.constant 0 : index
    %c0_15 = arith.constant 0 : index
    %42 = vector.load %arg3[%c0_13, %c0_14, %c0_15] : memref<2x9x32xf32, #tpu.memory_space<vmem>>, vector<2x9x32xf32>
    %43 = vector.shape_cast %18 : vector<9x32xf32> to vector<1x9x32xf32>
    %44 = vector.broadcast %43 : vector<1x9x32xf32> to vector<2x9x32xf32>
    %45 = arith.addf %42, %44 : vector<2x9x32xf32>
    %46 = vector.shape_cast %18 : vector<9x32xf32> to vector<1x9x32xf32>
    %47 = vector.broadcast %46 : vector<1x9x32xf32> to vector<2x9x32xf32>
    %48 = arith.addf %45, %47 : vector<2x9x32xf32>
    %49 = vector.broadcast %41 : vector<1x1x32xf32> to vector<2x9x32xf32>
    %50 = arith.addf %48, %49 : vector<2x9x32xf32>
    %cst_16 = arith.constant dense<0xFF800000> : vector<2x9xf32>
    %51 = vector.multi_reduction <maximumf>, %45, %cst_16 [2] : vector<2x9x32xf32> to vector<2x9xf32>
    %52 = vector.shape_cast %51 : vector<2x9xf32> to vector<2x9x1xf32>
    %53 = vector.broadcast %52 : vector<2x9x1xf32> to vector<2x9x32xf32>
    %54 = arith.subf %45, %53 : vector<2x9x32xf32>
    %55 = math.exp %54 : vector<2x9x32xf32>
    %cst_17 = arith.constant dense<0.000000e+00> : vector<2x9xf32>
    %56 = vector.multi_reduction <add>, %55, %cst_17 [2] : vector<2x9x32xf32> to vector<2x9xf32>
    %57 = vector.shape_cast %56 : vector<2x9xf32> to vector<2x9x1xf32>
    %58 = tpu.reciprocal %57 {approx = true} : vector<2x9x1xf32> -> vector<2x9x1xf32>
    %59 = vector.broadcast %58 : vector<2x9x1xf32> to vector<2x9x32xf32>
    %60 = arith.mulf %55, %59 : vector<2x9x32xf32>
    %61 = vector.broadcast %19 : vector<1x9x32xf32> to vector<2x9x32xf32>
    %62 = arith.mulf %60, %61 : vector<2x9x32xf32>
    "tpu.trace_start"() <{level = 10 : i32, message = "bij,bjc->bic"}> : () -> ()
    %cst_18 = arith.constant dense<0.000000e+00> : vector<2x9x32xf32>
    %63 = tpu.matmul %35, %62, %cst_18 {dimension_numbers = #tpu.dot_dimension_numbers<[2], [1], [1], [2], [0, 0, 0, 1, 1, 2], [0], [0]>} : vector<2x9x9xf32>, vector<2x9x32xf32>, vector<2x9x32xf32> -> vector<2x9x32xf32>
    "tpu.trace_stop"() : () -> ()
    "tpu.trace_start"() <{level = 10 : i32, message = "bic,bcd->bid"}> : () -> ()
    %cst_19 = arith.constant dense<0.000000e+00> : vector<2x9x32xf32>
    %64 = tpu.matmul %63, %39, %cst_19 {dimension_numbers = #tpu.dot_dimension_numbers<[2], [1], [1], [2], [0, 0, 0, 1, 1, 2], [0], [0]>} : vector<2x9x32xf32>, vector<2x32x32xf32>, vector<2x9x32xf32> -> vector<2x9x32xf32>
    "tpu.trace_stop"() : () -> ()
    %65 = arith.addf %64, %50 : vector<2x9x32xf32>
    %cst_20 = arith.constant dense<0xFF800000> : vector<2x9xf32>
    %66 = vector.multi_reduction <maximumf>, %65, %cst_20 [2] : vector<2x9x32xf32> to vector<2x9xf32>
    %67 = vector.shape_cast %66 : vector<2x9xf32> to vector<2x9x1xf32>
    %68 = vector.broadcast %67 : vector<2x9x1xf32> to vector<2x9x32xf32>
    %69 = arith.subf %65, %68 : vector<2x9x32xf32>
    %70 = math.exp %69 : vector<2x9x32xf32>
    %cst_21 = arith.constant dense<0.000000e+00> : vector<2x9xf32>
    %71 = vector.multi_reduction <add>, %70, %cst_21 [2] : vector<2x9x32xf32> to vector<2x9xf32>
    %72 = vector.shape_cast %71 : vector<2x9xf32> to vector<2x9x1xf32>
    %73 = tpu.reciprocal %72 {approx = true} : vector<2x9x1xf32> -> vector<2x9x1xf32>
    %74 = vector.broadcast %73 : vector<2x9x1xf32> to vector<2x9x32xf32>
    %75 = arith.mulf %70, %74 : vector<2x9x32xf32>
    %76 = vector.broadcast %19 : vector<1x9x32xf32> to vector<2x9x32xf32>
    %77 = arith.mulf %75, %76 : vector<2x9x32xf32>
    "tpu.trace_start"() <{level = 10 : i32, message = "bij,bjc->bic"}> : () -> ()
    %cst_22 = arith.constant dense<0.000000e+00> : vector<2x9x32xf32>
    %78 = tpu.matmul %35, %77, %cst_22 {dimension_numbers = #tpu.dot_dimension_numbers<[2], [1], [1], [2], [0, 0, 0, 1, 1, 2], [0], [0]>} : vector<2x9x9xf32>, vector<2x9x32xf32>, vector<2x9x32xf32> -> vector<2x9x32xf32>
    "tpu.trace_stop"() : () -> ()
    "tpu.trace_start"() <{level = 10 : i32, message = "bic,bcd->bid"}> : () -> ()
    %cst_23 = arith.constant dense<0.000000e+00> : vector<2x9x32xf32>
    %79 = tpu.matmul %78, %39, %cst_23 {dimension_numbers = #tpu.dot_dimension_numbers<[2], [1], [1], [2], [0, 0, 0, 1, 1, 2], [0], [0]>} : vector<2x9x32xf32>, vector<2x32x32xf32>, vector<2x9x32xf32> -> vector<2x9x32xf32>
    "tpu.trace_stop"() : () -> ()
    %80 = arith.addf %79, %50 : vector<2x9x32xf32>
    %c0_24 = arith.constant 0 : index
    %c0_25 = arith.constant 0 : index
    %c0_26 = arith.constant 0 : index
    %81 = vector.load %arg6[%c0_24, %c0_25, %c0_26] : memref<2x9x32xf32, #tpu.memory_space<vmem>>, vector<2x9x32xf32>
    tpu.vector_store %arg6[%c0_24, %c0_25, %c0_26], %80 {strides = array<i32>} : memref<2x9x32xf32, #tpu.memory_space<vmem>>, vector<2x9x32xf32>,
    return
  }
  func.func @transform_0(%arg0: i32) -> (i32, i32) {
    %c0_i32 = arith.constant 0 : i32
    %c0_i32_0 = arith.constant 0 : i32
    return %arg0, %c0_i32 : i32, i32
  }
  func.func @transform_1(%arg0: i32) -> (i32, i32) {
    %c0_i32 = arith.constant 0 : i32
    %c0_i32_0 = arith.constant 0 : i32
    %c0_i32_1 = arith.constant 0 : i32
    return %c0_i32, %c0_i32_0 : i32, i32
  }
  func.func @transform_2(%arg0: i32) -> (i32, i32, i32) {
    %c0_i32 = arith.constant 0 : i32
    %c0_i32_0 = arith.constant 0 : i32
    %c0_i32_1 = arith.constant 0 : i32
    return %arg0, %c0_i32, %c0_i32_0 : i32, i32, i32
  }
  func.func @transform_3(%arg0: i32) -> (i32, i32) {
    %c0_i32 = arith.constant 0 : i32
    %c0_i32_0 = arith.constant 0 : i32
    %c0_i32_1 = arith.constant 0 : i32
    return %c0_i32, %c0_i32_0 : i32, i32
  }
  func.func @transform_4(%arg0: i32) -> (i32, i32) {
    %c0_i32 = arith.constant 0 : i32
    %c0_i32_0 = arith.constant 0 : i32
    %c0_i32_1 = arith.constant 0 : i32
    return %c0_i32, %c0_i32_0 : i32, i32
  }
  func.func @transform_5(%arg0: i32) -> (i32, i32, i32) {
    %c0_i32 = arith.constant 0 : i32
    %c0_i32_0 = arith.constant 0 : i32
    %c0_i32_1 = arith.constant 0 : i32
    return %arg0, %c0_i32, %c0_i32_0 : i32, i32, i32
  }
}

</mosaic_0001>

<llo_original>
// kernel: graph_crf_forward.1
$region0: #{graph_crf_forward.1}
  #allocation0 [shape = 'u32[]', space=smem, size = 0x4, offset = 0x4, fixed_abs, tag = 'smem constant byte address 0x4 - core index']
  #allocation1 [shape = 'u32[72,128]{1,0:T(1,128)}', space=vmem, size = 0x9000, scoped, tag = 'internal scratch']
  %s0 = inlined_call_operand.vmem [shape: s32[2,1], index: 0, kind: input, shape index: {}]
  %s1 = inlined_call_operand.vmem [shape: f32[9,9], index: 1, kind: input, shape index: {}]
  %s2 = inlined_call_operand.vmem [shape: f32[2,9,32], index: 2, kind: input, shape index: {}]
  %s3 = inlined_call_operand.vmem [shape: f32[32,32], index: 3, kind: input, shape index: {}]
  %s4 = inlined_call_operand.vmem [shape: f32[1,32], index: 4, kind: input, shape index: {}]
  %s5 = inlined_call_operand.vmem [shape: f32[2,9,32], index: 5, kind: output, shape index: {}]
  %s6 = sld [smem:[#allocation0]]
  $region30: #{graph_crf_forward.1} parent=0
    _
  %s8 = ssub.s32 1, %s6
  %s9 = scalar_select 0, %s8, %s6
  // Predicated region
  $region2: #{graph_crf_forward.1} parent=0 // pred_check
    _
  $region3: #{graph_crf_forward.1} parent=0 // pred_check_branch
    %11 = sbr.rel (0) target = $region5
  $region4: #{graph_crf_forward.1} parent=0 // pred_region
    _
  $region5: #{graph_crf_forward.1} parent=0 // pred_fallthru
    _
  // Predicated region
  $region6: #{graph_crf_forward.1} parent=0 // pred_check
    _
  $region7: #{graph_crf_forward.1} parent=0 // pred_check_branch
    %13 = sbr.rel (0) target = $region9
  $region8: #{graph_crf_forward.1} parent=0 // pred_region
    _
  $region9: #{graph_crf_forward.1} parent=0 // pred_fallthru
    _
  // Predicated region
  $region10: #{graph_crf_forward.1} parent=0 // pred_check
    _
  $region11: #{graph_crf_forward.1} parent=0 // pred_check_branch
    %15 = sbr.rel (0) target = $region13
  $region12: #{graph_crf_forward.1} parent=0 // pred_region
    _
  $region13: #{graph_crf_forward.1} parent=0 // pred_fallthru
    _
  // Predicated region
  $region14: #{graph_crf_forward.1} parent=0 // pred_check
    _
  $region15: #{graph_crf_forward.1} parent=0 // pred_check_branch
    %17 = sbr.rel (0) target = $region17
  $region16: #{graph_crf_forward.1} parent=0 // pred_region
    _
  $region17: #{graph_crf_forward.1} parent=0 // pred_fallthru
    _
  // Predicated region
  $region18: #{graph_crf_forward.1} parent=0 // pred_check
    _
  $region19: #{graph_crf_forward.1} parent=0 // pred_check_branch
    %19 = sbr.rel (0) target = $region21
  $region20: #{graph_crf_forward.1} parent=0 // pred_region
    _
  $region21: #{graph_crf_forward.1} parent=0 // pred_fallthru
    _
  %v20 = vlaneseq
  %v21 = vshrl.u32 %v20, 7
  %v22 = vadd.s32 %v21, 8
  %v23 = vlaneseq
  %v24 = vand.u32 %v23, 127
  %vm25 = vcmp.lt.s32.totalorder %v21, 8
  %vm26 = vcmp.lt.s32.totalorder %v22, 8
  %vm27 = vcmp.lt.s32.totalorder %v24, 24
  %vm28 = vmand %vm25, %vm27
  %vm29 = vmand %vm26, %vm27
  %vm30 = vcmp.eq.s32.totalorder %v21, 8
  %vm31 = vcmp.eq.s32.totalorder %v22, 8
  %vm32 = vcmp.ge.s32.totalorder %v24, 24
  %vm33 = vmand %vm30, %vm32
  %vm34 = vmand %vm31, %vm32
  %vm35 = vmor %vm28, %vm33
  %vm36 = vmor %vm29, %vm34
  %v37 = vsel %vm35, 1, 0
  %v38 = vsel %vm36, 1, 0
  %v39 = vcvt.s32.f32 %v37
  %v40 = vcvt.s32.f32 %v38
  %v41 = vsub.f32 1.0, %v39
  %v42 = vsub.f32 1.0, %v40
  %v43 = vmul.f32 %v41, -1e+10
  %v44 = vmul.f32 %v42, -1e+10
  %v45 = vld [vmem:[%s0] sm:$0x3]
  %46 = vset.pattern.permute.xlu0 0
  %47 = vperm.xlu0 %46, %v45
  %v48 = vpop.permute.xlu0 %47
  %vm49 = vcmp.ge.s32.totalorder %v24, %v48
  %vm50 = vcmp.lt.s32.totalorder %v24, 8
  %vm51 = vmand %vm49, %vm50
  %v52 = vsel %vm51, 0.0, 1.0
  %v54 = vrot.slane %v52, 1
  %v55 = vld [vmem:[%s1] sm:$0xff]
  %v56 = vld [vmem:[%s1 + $0x8] sm:$0x1]
  %v57 = vperm.slane %v52, 0
  %v58 = vperm.slane %v54, 0
  %v61 = vmul.f32 %v57, %v55
  %v62 = vmul.f32 %v57, %v56
  %v63 = vmul.f32 %v58, %v55
  %v64 = vmul.f32 %v58, %v56
  %v65 = vld [vmem:[%s3] sm:$0xff]
  %v66 = vld [vmem:[%s3 + $0x8] sm:$0xff]
  %v67 = vld [vmem:[%s3 + $0x10] sm:$0xff]
  %v68 = vld [vmem:[%s3 + $0x18] sm:$0xff]
  %v69 = vld [vmem:[%s4] sm:$0x1]
  %v70 = vld [vmem:[%s2] sm:$0xff]
  %v71 = vld [vmem:[%s2 + $0x8] sm:$0x1]
  %v72 = vld [vmem:[%s2 + $0x10] sm:$0xff]
  %v73 = vld [vmem:[%s2 + $0x18] sm:$0x1]
  %v74 = vadd.f32 %v70, %v43
  %v75 = vadd.f32 %v71, %v44
  %v76 = vadd.f32 %v72, %v43
  %v77 = vadd.f32 %v73, %v44
  %v78 = vadd.f32 %v74, %v43
  %v79 = vadd.f32 %v75, %v44
  %v80 = vadd.f32 %v76, %v43
  %v81 = vadd.f32 %v77, %v44
  %v83 = vperm.slane %v69, 0
  %v85 = vadd.f32 %v78, %v83
  %v86 = vadd.f32 %v79, %v83
  %v87 = vadd.f32 %v80, %v83
  %v88 = vadd.f32 %v81, %v83
  %vm89 = vcmask 261120
  %v90 = vsel %vm89, %v74, -inf
  %91 = vmax.xlane.f32.xlu0 %v90
  %v92 = vpop.xlane.xlu0 %91
  %vm93 = vcmask 253952
  %v94 = vsel %vm93, %v75, -inf
  %95 = vmax.xlane.f32.xlu0 %v94
  %v96 = vpop.xlane.xlu0 %95
  %v97 = vsel %vm89, %v76, -inf
  %98 = vmax.xlane.f32.xlu0 %v97
  %v99 = vpop.xlane.xlu0 %98
  %v100 = vsel %vm93, %v77, -inf
  %101 = vmax.xlane.f32.xlu0 %v100
  %v102 = vpop.xlane.xlu0 %101
  %v103 = vsub.f32 %v74, %v92
  %v104 = vsub.f32 %v75, %v96
  %v105 = vsub.f32 %v76, %v99
  %v106 = vsub.f32 %v77, %v102
  %v107 = vmul.f32 %v103, 1.442695
  %v108 = vpow.pop %v107
  %v109 = vmul.f32 %v104, 1.442695
  %v110 = vpow.pop %v109
  %v111 = vmul.f32 %v105, 1.442695
  %v112 = vpow.pop %v111
  %v113 = vmul.f32 %v106, 1.442695
  %v114 = vpow.pop %v113
  %v115 = vsel %vm89, %v108, 0.0
  %116 = vadd.xlane.f32.xlu0 %v115
  %v117 = vpop.xlane.xlu0 %116
  %v118 = vsel %vm93, %v110, 0.0
  %119 = vadd.xlane.f32.xlu0 %v118
  %v120 = vpop.xlane.xlu0 %119
  %v121 = vsel %vm89, %v112, 0.0
  %122 = vadd.xlane.f32.xlu0 %v121
  %v123 = vpop.xlane.xlu0 %122
  %v124 = vsel %vm93, %v114, 0.0
  %125 = vadd.xlane.f32.xlu0 %v124
  %v126 = vpop.xlane.xlu0 %125
  %v127 = vrcp.pop %v117
  %v128 = vrcp.pop %v120
  %v129 = vrcp.pop %v123
  %v130 = vrcp.pop %v126
  %v131 = vmul.f32 %v108, %v127
  %v132 = vmul.f32 %v110, %v128
  %v133 = vmul.f32 %v112, %v129
  %v134 = vmul.f32 %v114, %v130
  %v135 = vmul.f32 %v131, %v39
  %v136 = vmul.f32 %v132, %v40
  %v137 = vmul.f32 %v133, %v39
  %v138 = vmul.f32 %v134, %v40
  %vm139 = vcmask 72704
  %v141 = vsel %vm139, %v61, 0
  %v144 = vsel %vm139, %v62, 0
  %vm146 = vcmask 1040384
  %v148 = vsel %vm146, %v136, 0
  %150 = vmatpush.msra.mxu0 0.0
  %151 = vmatpush.msra.mxu0 0.0
  %152 = vmatpush.msra.mxu0 0.0
  %153 = vmatpush.msra.mxu0 0.0
  %154 = vmatpush.msra.mxu0 0.0
  %155 = vmatpush.msra.mxu0 0.0
  %156 = vmatpush.msra.mxu0 0.0
  %157 = vmatpush.msra.mxu0 0.0
  %158 = vmatpush.msra.mxu0 0.0
  %159 = vmatpush.msra.mxu0 0.0
  %160 = vmatpush.msra.mxu0 0.0
  %161 = vmatpush.msra.mxu0 0.0
  %162 = vmatpush.msra.mxu0 0.0
  %163 = vmatpush.msra.mxu0 0.0
  %164 = vmatpush.msra.mxu0 %v148
  %165 = vmatpush.msra.mxu0 %v135
  %166 = vmatmul.f32.gmra.mxu0 %v141
  %v167 = vpop.f32.mrf.mxu0
  %v168 = vadd.f32 0.0, %v167
  %169 = vmatmul.f32.gmra.mxu0 %v144
  %v170 = vpop.f32.mrf.mxu0
  %v171 = vadd.f32 0.0, %v170
  %172 = vdwg.mxu0
  %v174 = vsel %vm139, %v63, 0
  %v177 = vsel %vm139, %v64, 0
  %v180 = vsel %vm146, %v138, 0
  %182 = vmatpush.msra.mxu0 0.0
  %183 = vmatpush.msra.mxu0 0.0
  %184 = vmatpush.msra.mxu0 0.0
  %185 = vmatpush.msra.mxu0 0.0
  %186 = vmatpush.msra.mxu0 0.0
  %187 = vmatpush.msra.mxu0 0.0
  %188 = vmatpush.msra.mxu0 0.0
  %189 = vmatpush.msra.mxu0 0.0
  %190 = vmatpush.msra.mxu0 0.0
  %191 = vmatpush.msra.mxu0 0.0
  %192 = vmatpush.msra.mxu0 0.0
  %193 = vmatpush.msra.mxu0 0.0
  %194 = vmatpush.msra.mxu0 0.0
  %195 = vmatpush.msra.mxu0 0.0
  %196 = vmatpush.msra.mxu0 %v180
  %197 = vmatpush.msra.mxu0 %v137
  %198 = vmatmul.f32.gmra.mxu0 %v174
  %v199 = vpop.f32.mrf.mxu0
  %v200 = vadd.f32 0.0, %v199
  %201 = vmatmul.f32.gmra.mxu0 %v177
  %v202 = vpop.f32.mrf.mxu0
  %v203 = vadd.f32 0.0, %v202
  %204 = vdwg.mxu0
  %v206 = vsel %vm89, %v168, 0
  %v209 = vsel %vm89, %v171, 0
  %211 = vmatpush.msra.mxu0 0.0
  %212 = vmatpush.msra.mxu0 0.0
  %213 = vmatpush.msra.mxu0 0.0
  %214 = vmatpush.msra.mxu0 0.0
  %215 = vmatpush.msra.mxu0 0.0
  %216 = vmatpush.msra.mxu0 0.0
  %217 = vmatpush.msra.mxu0 0.0
  %218 = vmatpush.msra.mxu0 0.0
  %219 = vmatpush.msra.mxu0 0.0
  %220 = vmatpush.msra.mxu0 0.0
  %221 = vmatpush.msra.mxu0 0.0
  %222 = vmatpush.msra.mxu0 0.0
  %223 = vmatpush.msra.mxu0 %v68
  %224 = vmatpush.msra.mxu0 %v67
  %225 = vmatpush.msra.mxu0 %v66
  %226 = vmatpush.msra.mxu0 %v65
  %227 = vmatmul.f32.gmra.mxu0 %v206
  %v228 = vpop.f32.mrf.mxu0
  %v229 = vadd.f32 %v85, %v228
  %230 = vmatmul.f32.gmra.mxu0 %v209
  %v231 = vpop.f32.mrf.mxu0
  %v232 = vadd.f32 %v86, %v231
  %233 = vdwg.mxu0
  %v235 = vsel %vm89, %v200, 0
  %v238 = vsel %vm89, %v203, 0
  %240 = vmatpush.msra.mxu0 0.0
  %241 = vmatpush.msra.mxu0 0.0
  %242 = vmatpush.msra.mxu0 0.0
  %243 = vmatpush.msra.mxu0 0.0
  %244 = vmatpush.msra.mxu0 0.0
  %245 = vmatpush.msra.mxu0 0.0
  %246 = vmatpush.msra.mxu0 0.0
  %247 = vmatpush.msra.mxu0 0.0
  %248 = vmatpush.msra.mxu0 0.0
  %249 = vmatpush.msra.mxu0 0.0
  %250 = vmatpush.msra.mxu0 0.0
  %251 = vmatpush.msra.mxu0 0.0
  %252 = vmatpush.msra.mxu0 %v68
  %253 = vmatpush.msra.mxu0 %v67
  %254 = vmatpush.msra.mxu0 %v66
  %255 = vmatpush.msra.mxu0 %v65
  %256 = vmatmul.f32.gmra.mxu0 %v235
  %v257 = vpop.f32.mrf.mxu0
  %v258 = vadd.f32 %v87, %v257
  %259 = vmatmul.f32.gmra.mxu0 %v238
  %v260 = vpop.f32.mrf.mxu0
  %v261 = vadd.f32 %v88, %v260
  %262 = vdwg.mxu0
  %v263 = vsel %vm89, %v229, -inf
  %264 = vmax.xlane.f32.xlu0 %v263
  %v265 = vpop.xlane.xlu0 %264
  %v266 = vsel %vm93, %v232, -inf
  %267 = vmax.xlane.f32.xlu0 %v266
  %v268 = vpop.xlane.xlu0 %267
  %v269 = vsel %vm89, %v258, -inf
  %270 = vmax.xlane.f32.xlu0 %v269
  %v271 = vpop.xlane.xlu0 %270
  %v272 = vsel %vm93, %v261, -inf
  %273 = vmax.xlane.f32.xlu0 %v272
  %v274 = vpop.xlane.xlu0 %273
  %v275 = vsub.f32 %v229, %v265
  %v276 = vsub.f32 %v232, %v268
  %v277 = vsub.f32 %v258, %v271
  %v278 = vsub.f32 %v261, %v274
  %v279 = vmul.f32 %v275, 1.442695
  %v280 = vpow.pop %v279
  %v281 = vmul.f32 %v276, 1.442695
  %v282 = vpow.pop %v281
  %v283 = vmul.f32 %v277, 1.442695
  %v284 = vpow.pop %v283
  %v285 = vmul.f32 %v278, 1.442695
  %v286 = vpow.pop %v285
  %v287 = vsel %vm89, %v280, 0.0
  %288 = vadd.xlane.f32.xlu0 %v287
  %v289 = vpop.xlane.xlu0 %288
  %v290 = vsel %vm93, %v282, 0.0
  %291 = vadd.xlane.f32.xlu0 %v290
  %v292 = vpop.xlane.xlu0 %291
  %v293 = vsel %vm89, %v284, 0.0
  %294 = vadd.xlane.f32.xlu0 %v293
  %v295 = vpop.xlane.xlu0 %294
  %v296 = vsel %vm93, %v286, 0.0
  %297 = vadd.xlane.f32.xlu0 %v296
  %v298 = vpop.xlane.xlu0 %297
  %v299 = vrcp.pop %v289
  %v300 = vrcp.pop %v292
  %v301 = vrcp.pop %v295
  %v302 = vrcp.pop %v298
  %v303 = vmul.f32 %v280, %v299
  %v304 = vmul.f32 %v282, %v300
  %v305 = vmul.f32 %v284, %v301
  %v306 = vmul.f32 %v286, %v302
  %v307 = vmul.f32 %v303, %v39
  %v308 = vmul.f32 %v304, %v40
  %v309 = vmul.f32 %v305, %v39
  %v310 = vmul.f32 %v306, %v40
  %v312 = vsel %vm146, %v308, 0
  %314 = vmatpush.msra.mxu0 0.0
  %315 = vmatpush.msra.mxu0 0.0
  %316 = vmatpush.msra.mxu0 0.0
  %317 = vmatpush.msra.mxu0 0.0
  %318 = vmatpush.msra.mxu0 0.0
  %319 = vmatpush.msra.mxu0 0.0
  %320 = vmatpush.msra.mxu0 0.0
  %321 = vmatpush.msra.mxu0 0.0
  %322 = vmatpush.msra.mxu0 0.0
  %323 = vmatpush.msra.mxu0 0.0
  %324 = vmatpush.msra.mxu0 0.0
  %325 = vmatpush.msra.mxu0 0.0
  %326 = vmatpush.msra.mxu0 0.0
  %327 = vmatpush.msra.mxu0 0.0
  %328 = vmatpush.msra.mxu0 %v312
  %329 = vmatpush.msra.mxu0 %v307
  %330 = vmatmul.f32.gmra.mxu0 %v141
  %v331 = vpop.f32.mrf.mxu0
  %v332 = vadd.f32 0.0, %v331
  %333 = vmatmul.f32.gmra.mxu0 %v144
  %v334 = vpop.f32.mrf.mxu0
  %v335 = vadd.f32 0.0, %v334
  %336 = vdwg.mxu0
  %v338 = vsel %vm146, %v310, 0
  %340 = vmatpush.msra.mxu0 0.0
  %341 = vmatpush.msra.mxu0 0.0
  %342 = vmatpush.msra.mxu0 0.0
  %343 = vmatpush.msra.mxu0 0.0
  %344 = vmatpush.msra.mxu0 0.0
  %345 = vmatpush.msra.mxu0 0.0
  %346 = vmatpush.msra.mxu0 0.0
  %347 = vmatpush.msra.mxu0 0.0
  %348 = vmatpush.msra.mxu0 0.0
  %349 = vmatpush.msra.mxu0 0.0
  %350 = vmatpush.msra.mxu0 0.0
  %351 = vmatpush.msra.mxu0 0.0
  %352 = vmatpush.msra.mxu0 0.0
  %353 = vmatpush.msra.mxu0 0.0
  %354 = vmatpush.msra.mxu0 %v338
  %355 = vmatpush.msra.mxu0 %v309
  %356 = vmatmul.f32.gmra.mxu0 %v174
  %v357 = vpop.f32.mrf.mxu0
  %v358 = vadd.f32 0.0, %v357
  %359 = vmatmul.f32.gmra.mxu0 %v177
  %v360 = vpop.f32.mrf.mxu0
  %v361 = vadd.f32 0.0, %v360
  %362 = vdwg.mxu0
  %v364 = vsel %vm89, %v332, 0
  %v367 = vsel %vm89, %v335, 0
  %369 = vmatpush.msra.mxu0 0.0
  %370 = vmatpush.msra.mxu0 0.0
  %371 = vmatpush.msra.mxu0 0.0
  %372 = vmatpush.msra.mxu0 0.0
  %373 = vmatpush.msra.mxu0 0.0
  %374 = vmatpush.msra.mxu0 0.0
  %375 = vmatpush.msra.mxu0 0.0
  %376 = vmatpush.msra.mxu0 0.0
  %377 = vmatpush.msra.mxu0 0.0
  %378 = vmatpush.msra.mxu0 0.0
  %379 = vmatpush.msra.mxu0 0.0
  %380 = vmatpush.msra.mxu0 0.0
  %381 = vmatpush.msra.mxu0 %v68
  %382 = vmatpush.msra.mxu0 %v67
  %383 = vmatpush.msra.mxu0 %v66
  %384 = vmatpush.msra.mxu0 %v65
  %385 = vmatmul.f32.gmra.mxu0 %v364
  %v386 = vpop.f32.mrf.mxu0
  %v387 = vadd.f32 %v85, %v386
  %388 = vmatmul.f32.gmra.mxu0 %v367
  %v389 = vpop.f32.mrf.mxu0
  %v390 = vadd.f32 %v86, %v389
  %391 = vdwg.mxu0
  %v393 = vsel %vm89, %v358, 0
  %v396 = vsel %vm89, %v361, 0
  %398 = vmatpush.msra.mxu0 0.0
  %399 = vmatpush.msra.mxu0 0.0
  %400 = vmatpush.msra.mxu0 0.0
  %401 = vmatpush.msra.mxu0 0.0
  %402 = vmatpush.msra.mxu0 0.0
  %403 = vmatpush.msra.mxu0 0.0
  %404 = vmatpush.msra.mxu0 0.0
  %405 = vmatpush.msra.mxu0 0.0
  %406 = vmatpush.msra.mxu0 0.0
  %407 = vmatpush.msra.mxu0 0.0
  %408 = vmatpush.msra.mxu0 0.0
  %409 = vmatpush.msra.mxu0 0.0
  %410 = vmatpush.msra.mxu0 %v68
  %411 = vmatpush.msra.mxu0 %v67
  %412 = vmatpush.msra.mxu0 %v66
  %413 = vmatpush.msra.mxu0 %v65
  %414 = vmatmul.f32.gmra.mxu0 %v393
  %v415 = vpop.f32.mrf.mxu0
  %v416 = vadd.f32 %v87, %v415
  %417 = vmatmul.f32.gmra.mxu0 %v396
  %v418 = vpop.f32.mrf.mxu0
  %v419 = vadd.f32 %v88, %v418
  %420 = vdwg.mxu0
  %421 = vst.msk [vmem:[%s5] sm:$0xff] %vm89, %v387
  %422 = vst.msk [vmem:[%s5 + $0x8] sm:$0x1] %vm93, %v390
  %423 = vst.msk [vmem:[%s5 + $0x10] sm:$0xff] %vm89, %v416
  %424 = vst.msk [vmem:[%s5 + $0x18] sm:$0x1] %vm93, %v419
  // Predicated region
  $region22: #{graph_crf_forward.1} parent=0 // pred_check
    _
  $region23: #{graph_crf_forward.1} parent=0 // pred_check_branch
    %426 = sbr.rel (0) target = $region25
  $region24: #{graph_crf_forward.1} parent=0 // pred_region
    _
  $region25: #{graph_crf_forward.1} parent=0 // pred_fallthru
    _
  // Predicated region
  $region26: #{graph_crf_forward.1} parent=0 // pred_check
    _
  $region27: #{graph_crf_forward.1} parent=0 // pred_check_branch
    %428 = sbr.rel (0) target = $region29
  $region28: #{graph_crf_forward.1} parent=0 // pred_region
    _
  $region29: #{graph_crf_forward.1} parent=0 // pred_fallthru
    _

</llo_original>
